<compile_context>
chip_gen: v5e
topology: v5e:2x2
jax: 0.10.0
libtpu: 0.0.40
codegen_flags: <defaults>
</compile_context>

<pallas_src>
import jax
import jax.numpy as jnp
from jax.experimental import pallas as pl
from jax.experimental.pallas import tpu as pltpu


def _ru8(n: int) -> int:
    return (n + 7) // 8 * 8


def make_rnn_fc_kernel(T, Bp, I, H, D, offs):
    """Build the gridless kernel with static shape/offset constants closed over.

    x_ref:   (T*Bp, I)  time-major, batch-padded, flattened input.
    p_ref:   (R, 128)   packed parameter slab:
               rows [o_wih, o_wih+I), cols [0, H)  -> W_ih^T   (I, H)
               rows [o_whh, o_whh+H), cols [0, H)  -> W_hh^T   (H, H)
               row   o_bias,          cols [0, H)  -> b_ih+b_hh (1, H)
               rows [o_wfc, o_wfc+H), cols [0, D)  -> W_fc^T   (H, D)
               row   o_bfc,           cols [0, D)  -> b_fc      (1, D)
    out_ref: (T*Bp, D)  time-major, batch-padded, flattened output.
    """
    o_wih, o_whh, o_bias, o_wfc, o_bfc = offs

    def kernel(x_ref, p_ref, out_ref):
        # Carve parameters out of the packed slab (static slices).
        wih = p_ref[o_wih:o_wih + I, 0:H]            # (I, H)
        whh = p_ref[o_whh:o_whh + H, 0:H]            # (H, H), stays vreg-resident
        bias = p_ref[o_bias:o_bias + 1, 0:H]         # (1, H) = b_ih + b_hh
        wfc = p_ref[o_wfc:o_wfc + H, 0:D]            # (H, D)
        bfc = p_ref[o_bfc:o_bfc + 1, 0:D]            # (1, D)

        # (1) Batched, non-recurrent input projection + fused bias:
        #     one GEMM for all T steps. Stays 2-D (no (T,B,H) reshape).
        pre_all = (jnp.dot(x_ref[...], wih,
                           preferred_element_type=jnp.float32)
                   + bias)                            # (T*Bp, H)

        # (2) Serial recurrence. t=0 peeled (h_{-1}=0 -> no matmul). Static
        #     unroll at T=8; per-step slices are sublane-aligned row slices.
        h = jnp.tanh(pre_all[0:Bp])                   # (Bp, H)
        hs_list = [h]
        for t in range(1, T):
            pre_t = pre_all[t * Bp:(t + 1) * Bp]      # (Bp, H) aligned slice
            h = jnp.tanh(pre_t + jnp.dot(h, whh,
                                         preferred_element_type=jnp.float32))
            hs_list.append(h)

        # Hidden states never touch VMEM scratch: concat in vregs for the FC.
        hs = jnp.concatenate(hs_list, axis=0)         # (T*Bp, H)

        # (3) Batched, non-recurrent FC: one GEMM + bias, one store.
        out_ref[...] = (jnp.dot(hs, wfc, preferred_element_type=jnp.float32)
                        + bfc).astype(out_ref.dtype)  # (T*Bp, D)

    return kernel


def rnn_model_forward(x, w_ih, w_hh, b_ih, b_hh, w_fc, b_fc):
    """x: (B, T, I). Weights in PyTorch convention:
       w_ih (H, I), w_hh (H, H), b_ih (H,), b_hh (H,), w_fc (D, H), b_fc (D,).
       Returns (B, T, D)."""
    B, T, I = x.shape
    H = w_ih.shape[0]
    D = w_fc.shape[0]
    assert H <= 128 and D <= 128 and I <= 128, "packed-slab path assumes <=128 lanes"

    # ---- layout glue in plain JAX ----
    x = jnp.asarray(x, jnp.float32)
    Bp = max(8, _ru8(B))                               # pad batch to sublane tile
    x_p = jnp.zeros((Bp, T, I), jnp.float32).at[:B].set(x)
    x_tm = jnp.transpose(x_p, (1, 0, 2)).reshape(T * Bp, I)   # time-major, flat

    wih_t = jnp.asarray(w_ih, jnp.float32).T           # (I, H)
    whh_t = jnp.asarray(w_hh, jnp.float32).T           # (H, H)
    wfc_t = jnp.asarray(w_fc, jnp.float32).T           # (H, D)
    bias = jnp.asarray(b_ih, jnp.float32) + jnp.asarray(b_hh, jnp.float32)  # (H,)
    bfc = jnp.asarray(b_fc, jnp.float32)                # (D,)

    # Pack all parameters into one lane-padded (R, 128) slab (1 DMA, not 5).
    o_wih = 0
    o_whh = o_wih + _ru8(I)
    o_bias = o_whh + _ru8(H)
    o_wfc = o_bias + 8
    o_bfc = o_wfc + _ru8(H)
    R = o_bfc + 8
    params = jnp.zeros((R, 128), jnp.float32)
    params = params.at[o_wih:o_wih + I, :H].set(wih_t)
    params = params.at[o_whh:o_whh + H, :H].set(whh_t)
    params = params.at[o_bias, :H].set(bias)
    params = params.at[o_wfc:o_wfc + H, :D].set(wfc_t)
    params = params.at[o_bfc, :D].set(bfc)

    vmem = pl.BlockSpec(memory_space=pltpu.MemorySpace.VMEM)
    kernel = make_rnn_fc_kernel(T, Bp, I, H, D,
                                (o_wih, o_whh, o_bias, o_wfc, o_bfc))

    out_tm = pl.pallas_call(
        kernel,
        out_shape=jax.ShapeDtypeStruct((T * Bp, D), jnp.float32),
        in_specs=[vmem, vmem],
        out_specs=vmem,
    )(x_tm, params)

    # (T*Bp, D) time-major -> (B, T, D), dropping padded batch rows.
    return out_tm.reshape(T, Bp, D).transpose(1, 0, 2)[:B]


def reference_forward(x, w_ih, w_hh, b_ih, b_hh, w_fc, b_fc):
    """Pure-JAX reference matching torch.nn.RNN(batch_first=True) + Linear."""
    B, T, I = x.shape
    H = w_ih.shape[0]
    h = jnp.zeros((B, H), jnp.float32)
    outs = []
    for t in range(T):
        h = jnp.tanh(x[:, t, :] @ w_ih.T + b_ih + h @ w_hh.T + b_hh)
        outs.append(h)
    rnn_out = jnp.stack(outs, axis=1)                  # (B, T, H)
    return rnn_out @ w_fc.T + b_fc                     # (B, T, D)


if __name__ == "__main__":
    # Small shapes consistent with the module.
    B, T = 2, 8
    input_size, hidden_units, dense_units = 8, 32, 16

    key = jax.random.PRNGKey(0)
    kx, k1, k2, k3, k4, k5, k6 = jax.random.split(key, 7)

    # Deterministic synthetic parameters (PyTorch-style uniform(-1/sqrt(H), 1/sqrt(H))).
    s = 1.0 / jnp.sqrt(jnp.float32(hidden_units))
    x = jax.random.normal(kx, (B, T, input_size), jnp.float32)
    w_ih = jax.random.uniform(k1, (hidden_units, input_size), jnp.float32, -s, s)
    w_hh = jax.random.uniform(k2, (hidden_units, hidden_units), jnp.float32, -s, s)
    b_ih = jax.random.uniform(k3, (hidden_units,), jnp.float32, -s, s)
    b_hh = jax.random.uniform(k4, (hidden_units,), jnp.float32, -s, s)
    w_fc = jax.random.uniform(k5, (dense_units, hidden_units), jnp.float32, -s, s)
    b_fc = jax.random.uniform(k6, (dense_units,), jnp.float32, -s, s)

    out = rnn_model_forward(x, w_ih, w_hh, b_ih, b_hh, w_fc, b_fc)
    out = jax.block_until_ready(out)

    ref = reference_forward(x, w_ih, w_hh, b_ih, b_hh, w_fc, b_fc)
    assert out.shape == (B, T, dense_units), out.shape
    assert jnp.allclose(out, ref, atol=1e-5, rtol=1e-5), "mismatch vs reference"

    print("KERNEL_OK")
</pallas_src>

<mosaic_0001>
module attributes {stable_mosaic.version = 11 : i64} {
  func.func @kernel(%arg0: memref<64x8xf32, #tpu.memory_space<vmem>>, %arg1: memref<88x128xf32, #tpu.memory_space<vmem>>, %arg2: memref<64x16xf32, #tpu.memory_space<vmem>>) attributes {dimension_semantics = [], scalar_prefetch = 0 : i64, scratch_operands = 0 : i64, tpu.core_type = #tpu.core_type<tc>} {
    %c0 = arith.constant 0 : index
    %c0_0 = arith.constant 0 : index
    %0 = vector.load %arg1[%c0, %c0_0] : memref<88x128xf32, #tpu.memory_space<vmem>>, vector<8x32xf32>
    %c8 = arith.constant 8 : index
    %c0_1 = arith.constant 0 : index
    %1 = vector.load %arg1[%c8, %c0_1] : memref<88x128xf32, #tpu.memory_space<vmem>>, vector<32x32xf32>
    %c40 = arith.constant 40 : index
    %c0_2 = arith.constant 0 : index
    %2 = vector.load %arg1[%c40, %c0_2] : memref<88x128xf32, #tpu.memory_space<vmem>>, vector<1x32xf32>
    %c48 = arith.constant 48 : index
    %c0_3 = arith.constant 0 : index
    %3 = vector.load %arg1[%c48, %c0_3] : memref<88x128xf32, #tpu.memory_space<vmem>>, vector<32x16xf32>
    %c80 = arith.constant 80 : index
    %c0_4 = arith.constant 0 : index
    %4 = vector.load %arg1[%c80, %c0_4] : memref<88x128xf32, #tpu.memory_space<vmem>>, vector<1x16xf32>
    %c0_5 = arith.constant 0 : index
    %c0_6 = arith.constant 0 : index
    %5 = vector.load %arg0[%c0_5, %c0_6] : memref<64x8xf32, #tpu.memory_space<vmem>>, vector<64x8xf32>
    %cst = arith.constant dense<0.000000e+00> : vector<64x32xf32>
    %6 = tpu.matmul %5, %0, %cst {dimension_numbers = #tpu.dot_dimension_numbers<[1], [0], [0], [1], [0, 0, 1, 1], [], []>} : vector<64x8xf32>, vector<8x32xf32>, vector<64x32xf32> -> vector<64x32xf32>
    %7 = vector.broadcast %2 : vector<1x32xf32> to vector<64x32xf32>
    %8 = arith.addf %6, %7 : vector<64x32xf32>
    %9 = vector.extract_strided_slice %8 {offsets = [0, 0], sizes = [8, 32], strides = [1, 1]} : vector<64x32xf32> to vector<8x32xf32>
    %10 = math.tanh %9 : vector<8x32xf32>
    %11 = vector.extract_strided_slice %8 {offsets = [8, 0], sizes = [8, 32], strides = [1, 1]} : vector<64x32xf32> to vector<8x32xf32>
    %cst_7 = arith.constant dense<0.000000e+00> : vector<8x32xf32>
    %12 = tpu.matmul %10, %1, %cst_7 {dimension_numbers = #tpu.dot_dimension_numbers<[1], [0], [0], [1], [0, 0, 1, 1], [], []>} : vector<8x32xf32>, vector<32x32xf32>, vector<8x32xf32> -> vector<8x32xf32>
    %13 = arith.addf %11, %12 : vector<8x32xf32>
    %14 = math.tanh %13 : vector<8x32xf32>
    %15 = vector.extract_strided_slice %8 {offsets = [16, 0], sizes = [8, 32], strides = [1, 1]} : vector<64x32xf32> to vector<8x32xf32>
    %cst_8 = arith.constant dense<0.000000e+00> : vector<8x32xf32>
    %16 = tpu.matmul %14, %1, %cst_8 {dimension_numbers = #tpu.dot_dimension_numbers<[1], [0], [0], [1], [0, 0, 1, 1], [], []>} : vector<8x32xf32>, vector<32x32xf32>, vector<8x32xf32> -> vector<8x32xf32>
    %17 = arith.addf %15, %16 : vector<8x32xf32>
    %18 = math.tanh %17 : vector<8x32xf32>
    %19 = vector.extract_strided_slice %8 {offsets = [24, 0], sizes = [8, 32], strides = [1, 1]} : vector<64x32xf32> to vector<8x32xf32>
    %cst_9 = arith.constant dense<0.000000e+00> : vector<8x32xf32>
    %20 = tpu.matmul %18, %1, %cst_9 {dimension_numbers = #tpu.dot_dimension_numbers<[1], [0], [0], [1], [0, 0, 1, 1], [], []>} : vector<8x32xf32>, vector<32x32xf32>, vector<8x32xf32> -> vector<8x32xf32>
    %21 = arith.addf %19, %20 : vector<8x32xf32>
    %22 = math.tanh %21 : vector<8x32xf32>
    %23 = vector.extract_strided_slice %8 {offsets = [32, 0], sizes = [8, 32], strides = [1, 1]} : vector<64x32xf32> to vector<8x32xf32>
    %cst_10 = arith.constant dense<0.000000e+00> : vector<8x32xf32>
    %24 = tpu.matmul %22, %1, %cst_10 {dimension_numbers = #tpu.dot_dimension_numbers<[1], [0], [0], [1], [0, 0, 1, 1], [], []>} : vector<8x32xf32>, vector<32x32xf32>, vector<8x32xf32> -> vector<8x32xf32>
    %25 = arith.addf %23, %24 : vector<8x32xf32>
    %26 = math.tanh %25 : vector<8x32xf32>
    %27 = vector.extract_strided_slice %8 {offsets = [40, 0], sizes = [8, 32], strides = [1, 1]} : vector<64x32xf32> to vector<8x32xf32>
    %cst_11 = arith.constant dense<0.000000e+00> : vector<8x32xf32>
    %28 = tpu.matmul %26, %1, %cst_11 {dimension_numbers = #tpu.dot_dimension_numbers<[1], [0], [0], [1], [0, 0, 1, 1], [], []>} : vector<8x32xf32>, vector<32x32xf32>, vector<8x32xf32> -> vector<8x32xf32>
    %29 = arith.addf %27, %28 : vector<8x32xf32>
    %30 = math.tanh %29 : vector<8x32xf32>
    %31 = vector.extract_strided_slice %8 {offsets = [48, 0], sizes = [8, 32], strides = [1, 1]} : vector<64x32xf32> to vector<8x32xf32>
    %cst_12 = arith.constant dense<0.000000e+00> : vector<8x32xf32>
    %32 = tpu.matmul %30, %1, %cst_12 {dimension_numbers = #tpu.dot_dimension_numbers<[1], [0], [0], [1], [0, 0, 1, 1], [], []>} : vector<8x32xf32>, vector<32x32xf32>, vector<8x32xf32> -> vector<8x32xf32>
    %33 = arith.addf %31, %32 : vector<8x32xf32>
    %34 = math.tanh %33 : vector<8x32xf32>
    %35 = vector.extract_strided_slice %8 {offsets = [56, 0], sizes = [8, 32], strides = [1, 1]} : vector<64x32xf32> to vector<8x32xf32>
    %cst_13 = arith.constant dense<0.000000e+00> : vector<8x32xf32>
    %36 = tpu.matmul %34, %1, %cst_13 {dimension_numbers = #tpu.dot_dimension_numbers<[1], [0], [0], [1], [0, 0, 1, 1], [], []>} : vector<8x32xf32>, vector<32x32xf32>, vector<8x32xf32> -> vector<8x32xf32>
    %37 = arith.addf %35, %36 : vector<8x32xf32>
    %38 = math.tanh %37 : vector<8x32xf32>
    %39 = tpu.concatenate %10, %14, %18, %22, %26, %30, %34, %38 in 0 : vector<8x32xf32>, vector<8x32xf32>, vector<8x32xf32>, vector<8x32xf32>, vector<8x32xf32>, vector<8x32xf32>, vector<8x32xf32>, vector<8x32xf32> -> vector<64x32xf32>
    %cst_14 = arith.constant dense<0.000000e+00> : vector<64x16xf32>
    %40 = tpu.matmul %39, %3, %cst_14 {dimension_numbers = #tpu.dot_dimension_numbers<[1], [0], [0], [1], [0, 0, 1, 1], [], []>} : vector<64x32xf32>, vector<32x16xf32>, vector<64x16xf32> -> vector<64x16xf32>
    %41 = vector.broadcast %4 : vector<1x16xf32> to vector<64x16xf32>
    %42 = arith.addf %40, %41 : vector<64x16xf32>
    %c0_15 = arith.constant 0 : index
    %c0_16 = arith.constant 0 : index
    %43 = vector.load %arg2[%c0_15, %c0_16] : memref<64x16xf32, #tpu.memory_space<vmem>>, vector<64x16xf32>
    tpu.vector_store %arg2[%c0_15, %c0_16], %42 {strides = array<i32>} : memref<64x16xf32, #tpu.memory_space<vmem>>, vector<64x16xf32>,
    return
  }
}

</mosaic_0001>

<llo_original>
// kernel: tpu_custom_call.1
$region0: #{tpu_custom_call.1}
  #allocation0 [shape = 'u32[]', space=smem, size = 0x4, offset = 0x4, fixed_abs, tag = 'smem constant byte address 0x4 - core index']
  #allocation1 [shape = 'u32[72,128]{1,0:T(1,128)}', space=vmem, size = 0x9000, scoped, tag = 'internal scratch']
  %s0 = inlined_call_operand.vmem [shape: f32[64,8], index: 0, kind: input, shape index: {}]
  %s1 = inlined_call_operand.hbm [shape: f32[88,128], index: 1, kind: input, shape index: {}]
  %s2 = inlined_call_operand.vmem [shape: f32[64,16], index: 2, kind: output, shape index: {}]
  %s3 = sld [smem:[#allocation0]]
  $region22: #{tpu_custom_call.1} parent=0
    _
  %s5 = ssub.s32 1, %s3
  %s6 = scalar_select 0, %s5, %s3
  $region1: #{tpu_custom_call.1} parent=0
    #allocation2 [shape = 'u8[45056]{0}', space=vmem, size = 0xb000, scoped, tag = 'input window, operand 1, single buffered']
    #allocation3 [shape = 's32[1]{0}', space=sflag, size = 0x4, scoped, tag = 'scoped memory for tpu_custom_call.1']
    %7 = vsyncpa [#allocation3], 0
    // Predicated region
    $region2: #{tpu_custom_call.1} parent=1 // pred_check
      _
    $region3: #{tpu_custom_call.1} parent=1 // pred_check_branch
      %9 = sbr.rel (0) target = $region5
    $region4: #{tpu_custom_call.1} parent=1 // pred_region
      _
    $region5: #{tpu_custom_call.1} parent=1 // pred_fallthru
      _
    // Predicated region
    $region6: #{tpu_custom_call.1} parent=1 // pred_check
      _
    $region7: #{tpu_custom_call.1} parent=1 // pred_check_branch
      %11 = sbr.rel (0) target = $region9
    $region8: #{tpu_custom_call.1} parent=1 // pred_region
      %13 = vsyncadd [#allocation3], 0
      %s14 = sshll.u32 %s1, 4
      %s15 = int_to_ptr.hbm [resolvable:$true] %s14
      %s16 = sshll.u32 [#allocation2], 4
      %s17 = int_to_ptr.vmem [resolvable:$true] %s16
      %22 = dma.hbm_to_vmem [thread:$0]  %s15, 1408, %s17, [#allocation3], 128, 128, 8
    $region9: #{tpu_custom_call.1} parent=1 // pred_fallthru
      _
    // Predicated region
    $region10: #{tpu_custom_call.1} parent=1 // pred_check
      _
    $region11: #{tpu_custom_call.1} parent=1 // pred_check_branch
      %24 = sbr.rel (0) target = $region13
    $region12: #{tpu_custom_call.1} parent=1 // pred_region
      %26 = dma.done [#allocation3], 1408
    $region13: #{tpu_custom_call.1} parent=1 // pred_fallthru
      _
    %v27 = vld [vmem:[#allocation2] sm:$0xff]
    %v28 = vld [vmem:[#allocation2 + $0x8] sm:$0xff]
    %v29 = vld [vmem:[#allocation2 + $0x10] sm:$0xff]
    %v30 = vld [vmem:[#allocation2 + $0x18] sm:$0xff]
    %v31 = vld [vmem:[#allocation2 + $0x20] sm:$0xff]
    %v32 = vld [vmem:[#allocation2 + $0x28] sm:$0x1]
    %v33 = vld [vmem:[#allocation2 + $0x30] sm:$0xff]
    %v34 = vld [vmem:[#allocation2 + $0x38] sm:$0xff]
    %v35 = vld [vmem:[#allocation2 + $0x40] sm:$0xff]
    %v36 = vld [vmem:[#allocation2 + $0x48] sm:$0xff]
    %v37 = vld [vmem:[#allocation2 + $0x50] sm:$0x1]
    %v38 = vld [vmem:[%s0] sm:$0xff]
    %v39 = vld [vmem:[%s0 + $0x8] sm:$0xff]
    %v40 = vld [vmem:[%s0 + $0x10] sm:$0xff]
    %v41 = vld [vmem:[%s0 + $0x18] sm:$0xff]
    %v42 = vld [vmem:[%s0 + $0x20] sm:$0xff]
    %v43 = vld [vmem:[%s0 + $0x28] sm:$0xff]
    %v44 = vld [vmem:[%s0 + $0x30] sm:$0xff]
    %v45 = vld [vmem:[%s0 + $0x38] sm:$0xff]
    %v46 = vperm.slane %v32, 0
    %vm47 = vcmask 64512
    %v49 = vsel %vm47, %v38, 0
    %v52 = vsel %vm47, %v39, 0
    %v55 = vsel %vm47, %v40, 0
    %v58 = vsel %vm47, %v41, 0
    %v61 = vsel %vm47, %v42, 0
    %v64 = vsel %vm47, %v43, 0
    %v67 = vsel %vm47, %v44, 0
    %v70 = vsel %vm47, %v45, 0
    %72 = vmatpush.msra.mxu0 0.0
    %73 = vmatpush.msra.mxu0 0.0
    %74 = vmatpush.msra.mxu0 0.0
    %75 = vmatpush.msra.mxu0 0.0
    %76 = vmatpush.msra.mxu0 0.0
    %77 = vmatpush.msra.mxu0 0.0
    %78 = vmatpush.msra.mxu0 0.0
    %79 = vmatpush.msra.mxu0 0.0
    %80 = vmatpush.msra.mxu0 0.0
    %81 = vmatpush.msra.mxu0 0.0
    %82 = vmatpush.msra.mxu0 0.0
    %83 = vmatpush.msra.mxu0 0.0
    %84 = vmatpush.msra.mxu0 0.0
    %85 = vmatpush.msra.mxu0 0.0
    %86 = vmatpush.msra.mxu0 0.0
    %87 = vmatpush.msra.mxu0 %v27
    %88 = vmatmul.f32.gmra.mxu0 %v49
    %v89 = vpop.f32.mrf.mxu0
    %v90 = vadd.f32 %v46, %v89
    %91 = vmatmul.f32.gmra.mxu0 %v52
    %v92 = vpop.f32.mrf.mxu0
    %v93 = vadd.f32 %v46, %v92
    %94 = vmatmul.f32.gmra.mxu0 %v55
    %v95 = vpop.f32.mrf.mxu0
    %v96 = vadd.f32 %v46, %v95
    %97 = vmatmul.f32.gmra.mxu0 %v58
    %v98 = vpop.f32.mrf.mxu0
    %v99 = vadd.f32 %v46, %v98
    %100 = vmatmul.f32.gmra.mxu0 %v61
    %v101 = vpop.f32.mrf.mxu0
    %v102 = vadd.f32 %v46, %v101
    %103 = vmatmul.f32.gmra.mxu0 %v64
    %v104 = vpop.f32.mrf.mxu0
    %v105 = vadd.f32 %v46, %v104
    %106 = vmatmul.f32.gmra.mxu0 %v67
    %v107 = vpop.f32.mrf.mxu0
    %v108 = vadd.f32 %v46, %v107
    %109 = vmatmul.f32.gmra.mxu0 %v70
    %v110 = vpop.f32.mrf.mxu0
    %v111 = vadd.f32 %v46, %v110
    %112 = vdwg.mxu0
    %v113 = vtanh.pop %v90
    %vm114 = vcmask 261120
    %v116 = vsel %vm114, %v113, 0
    %118 = vmatpush.msra.mxu0 0.0
    %119 = vmatpush.msra.mxu0 0.0
    %120 = vmatpush.msra.mxu0 0.0
    %121 = vmatpush.msra.mxu0 0.0
    %122 = vmatpush.msra.mxu0 0.0
    %123 = vmatpush.msra.mxu0 0.0
    %124 = vmatpush.msra.mxu0 0.0
    %125 = vmatpush.msra.mxu0 0.0
    %126 = vmatpush.msra.mxu0 0.0
    %127 = vmatpush.msra.mxu0 0.0
    %128 = vmatpush.msra.mxu0 0.0
    %129 = vmatpush.msra.mxu0 0.0
    %130 = vmatpush.msra.mxu0 %v31
    %131 = vmatpush.msra.mxu0 %v30
    %132 = vmatpush.msra.mxu0 %v29
    %133 = vmatpush.msra.mxu0 %v28
    %134 = vmatmul.f32.gmra.mxu0 %v116
    %v135 = vpop.f32.mrf.mxu0
    %v136 = vadd.f32 0.0, %v135
    %137 = vdwg.mxu0
    %v138 = vadd.f32 %v93, %v136
    %v139 = vtanh.pop %v138
    %v141 = vsel %vm114, %v139, 0
    %143 = vmatpush.msra.mxu0 0.0
    %144 = vmatpush.msra.mxu0 0.0
    %145 = vmatpush.msra.mxu0 0.0
    %146 = vmatpush.msra.mxu0 0.0
    %147 = vmatpush.msra.mxu0 0.0
    %148 = vmatpush.msra.mxu0 0.0
    %149 = vmatpush.msra.mxu0 0.0
    %150 = vmatpush.msra.mxu0 0.0
    %151 = vmatpush.msra.mxu0 0.0
    %152 = vmatpush.msra.mxu0 0.0
    %153 = vmatpush.msra.mxu0 0.0
    %154 = vmatpush.msra.mxu0 0.0
    %155 = vmatpush.msra.mxu0 %v31
    %156 = vmatpush.msra.mxu0 %v30
    %157 = vmatpush.msra.mxu0 %v29
    %158 = vmatpush.msra.mxu0 %v28
    %159 = vmatmul.f32.gmra.mxu0 %v141
    %v160 = vpop.f32.mrf.mxu0
    %v161 = vadd.f32 0.0, %v160
    %162 = vdwg.mxu0
    %v163 = vadd.f32 %v96, %v161
    %v164 = vtanh.pop %v163
    %v166 = vsel %vm114, %v164, 0
    %168 = vmatpush.msra.mxu0 0.0
    %169 = vmatpush.msra.mxu0 0.0
    %170 = vmatpush.msra.mxu0 0.0
    %171 = vmatpush.msra.mxu0 0.0
    %172 = vmatpush.msra.mxu0 0.0
    %173 = vmatpush.msra.mxu0 0.0
    %174 = vmatpush.msra.mxu0 0.0
    %175 = vmatpush.msra.mxu0 0.0
    %176 = vmatpush.msra.mxu0 0.0
    %177 = vmatpush.msra.mxu0 0.0
    %178 = vmatpush.msra.mxu0 0.0
    %179 = vmatpush.msra.mxu0 0.0
    %180 = vmatpush.msra.mxu0 %v31
    %181 = vmatpush.msra.mxu0 %v30
    %182 = vmatpush.msra.mxu0 %v29
    %183 = vmatpush.msra.mxu0 %v28
    %184 = vmatmul.f32.gmra.mxu0 %v166
    %v185 = vpop.f32.mrf.mxu0
    %v186 = vadd.f32 0.0, %v185
    %187 = vdwg.mxu0
    %v188 = vadd.f32 %v99, %v186
    %v189 = vtanh.pop %v188
    %v191 = vsel %vm114, %v189, 0
    %193 = vmatpush.msra.mxu0 0.0
    %194 = vmatpush.msra.mxu0 0.0
    %195 = vmatpush.msra.mxu0 0.0
    %196 = vmatpush.msra.mxu0 0.0
    %197 = vmatpush.msra.mxu0 0.0
    %198 = vmatpush.msra.mxu0 0.0
    %199 = vmatpush.msra.mxu0 0.0
    %200 = vmatpush.msra.mxu0 0.0
    %201 = vmatpush.msra.mxu0 0.0
    %202 = vmatpush.msra.mxu0 0.0
    %203 = vmatpush.msra.mxu0 0.0
    %204 = vmatpush.msra.mxu0 0.0
    %205 = vmatpush.msra.mxu0 %v31
    %206 = vmatpush.msra.mxu0 %v30
    %207 = vmatpush.msra.mxu0 %v29
    %208 = vmatpush.msra.mxu0 %v28
    %209 = vmatmul.f32.gmra.mxu0 %v191
    %v210 = vpop.f32.mrf.mxu0
    %v211 = vadd.f32 0.0, %v210
    %212 = vdwg.mxu0
    %v213 = vadd.f32 %v102, %v211
    %v214 = vtanh.pop %v213
    %v216 = vsel %vm114, %v214, 0
    %218 = vmatpush.msra.mxu0 0.0
    %219 = vmatpush.msra.mxu0 0.0
    %220 = vmatpush.msra.mxu0 0.0
    %221 = vmatpush.msra.mxu0 0.0
    %222 = vmatpush.msra.mxu0 0.0
    %223 = vmatpush.msra.mxu0 0.0
    %224 = vmatpush.msra.mxu0 0.0
    %225 = vmatpush.msra.mxu0 0.0
    %226 = vmatpush.msra.mxu0 0.0
    %227 = vmatpush.msra.mxu0 0.0
    %228 = vmatpush.msra.mxu0 0.0
    %229 = vmatpush.msra.mxu0 0.0
    %230 = vmatpush.msra.mxu0 %v31
    %231 = vmatpush.msra.mxu0 %v30
    %232 = vmatpush.msra.mxu0 %v29
    %233 = vmatpush.msra.mxu0 %v28
    %234 = vmatmul.f32.gmra.mxu0 %v216
    %v235 = vpop.f32.mrf.mxu0
    %v236 = vadd.f32 0.0, %v235
    %237 = vdwg.mxu0
    %v238 = vadd.f32 %v105, %v236
    %v239 = vtanh.pop %v238
    %v241 = vsel %vm114, %v239, 0
    %243 = vmatpush.msra.mxu0 0.0
    %244 = vmatpush.msra.mxu0 0.0
    %245 = vmatpush.msra.mxu0 0.0
    %246 = vmatpush.msra.mxu0 0.0
    %247 = vmatpush.msra.mxu0 0.0
    %248 = vmatpush.msra.mxu0 0.0
    %249 = vmatpush.msra.mxu0 0.0
    %250 = vmatpush.msra.mxu0 0.0
    %251 = vmatpush.msra.mxu0 0.0
    %252 = vmatpush.msra.mxu0 0.0
    %253 = vmatpush.msra.mxu0 0.0
    %254 = vmatpush.msra.mxu0 0.0
    %255 = vmatpush.msra.mxu0 %v31
    %256 = vmatpush.msra.mxu0 %v30
    %257 = vmatpush.msra.mxu0 %v29
    %258 = vmatpush.msra.mxu0 %v28
    %259 = vmatmul.f32.gmra.mxu0 %v241
    %v260 = vpop.f32.mrf.mxu0
    %v261 = vadd.f32 0.0, %v260
    %262 = vdwg.mxu0
    %v263 = vadd.f32 %v108, %v261
    %v264 = vtanh.pop %v263
    %v266 = vsel %vm114, %v264, 0
    %268 = vmatpush.msra.mxu0 0.0
    %269 = vmatpush.msra.mxu0 0.0
    %270 = vmatpush.msra.mxu0 0.0
    %271 = vmatpush.msra.mxu0 0.0
    %272 = vmatpush.msra.mxu0 0.0
    %273 = vmatpush.msra.mxu0 0.0
    %274 = vmatpush.msra.mxu0 0.0
    %275 = vmatpush.msra.mxu0 0.0
    %276 = vmatpush.msra.mxu0 0.0
    %277 = vmatpush.msra.mxu0 0.0
    %278 = vmatpush.msra.mxu0 0.0
    %279 = vmatpush.msra.mxu0 0.0
    %280 = vmatpush.msra.mxu0 %v31
    %281 = vmatpush.msra.mxu0 %v30
    %282 = vmatpush.msra.mxu0 %v29
    %283 = vmatpush.msra.mxu0 %v28
    %284 = vmatmul.f32.gmra.mxu0 %v266
    %v285 = vpop.f32.mrf.mxu0
    %v286 = vadd.f32 0.0, %v285
    %287 = vdwg.mxu0
    %v288 = vadd.f32 %v111, %v286
    %v289 = vtanh.pop %v288
    %v290 = vperm.slane %v37, 0
    %v292 = vsel %vm114, %v289, 0
    %294 = vmatpush.msra.mxu0 0.0
    %295 = vmatpush.msra.mxu0 0.0
    %296 = vmatpush.msra.mxu0 0.0
    %297 = vmatpush.msra.mxu0 0.0
    %298 = vmatpush.msra.mxu0 0.0
    %299 = vmatpush.msra.mxu0 0.0
    %300 = vmatpush.msra.mxu0 0.0
    %301 = vmatpush.msra.mxu0 0.0
    %302 = vmatpush.msra.mxu0 0.0
    %303 = vmatpush.msra.mxu0 0.0
    %304 = vmatpush.msra.mxu0 0.0
    %305 = vmatpush.msra.mxu0 0.0
    %306 = vmatpush.msra.mxu0 %v36
    %307 = vmatpush.msra.mxu0 %v35
    %308 = vmatpush.msra.mxu0 %v34
    %309 = vmatpush.msra.mxu0 %v33
    %310 = vmatmul.f32.gmra.mxu0 %v116
    %v311 = vpop.f32.mrf.mxu0
    %v312 = vadd.f32 %v290, %v311
    %313 = vmatmul.f32.gmra.mxu0 %v141
    %v314 = vpop.f32.mrf.mxu0
    %v315 = vadd.f32 %v290, %v314
    %316 = vmatmul.f32.gmra.mxu0 %v166
    %v317 = vpop.f32.mrf.mxu0
    %v318 = vadd.f32 %v290, %v317
    %319 = vmatmul.f32.gmra.mxu0 %v191
    %v320 = vpop.f32.mrf.mxu0
    %v321 = vadd.f32 %v290, %v320
    %322 = vmatmul.f32.gmra.mxu0 %v216
    %v323 = vpop.f32.mrf.mxu0
    %v324 = vadd.f32 %v290, %v323
    %325 = vmatmul.f32.gmra.mxu0 %v241
    %v326 = vpop.f32.mrf.mxu0
    %v327 = vadd.f32 %v290, %v326
    %328 = vmatmul.f32.gmra.mxu0 %v266
    %v329 = vpop.f32.mrf.mxu0
    %v330 = vadd.f32 %v290, %v329
    %331 = vmatmul.f32.gmra.mxu0 %v292
    %v332 = vpop.f32.mrf.mxu0
    %v333 = vadd.f32 %v290, %v332
    %334 = vdwg.mxu0
    %vm335 = vcmask 130048
    %336 = vst.msk [vmem:[%s2] sm:$0xff] %vm335, %v312
    %337 = vst.msk [vmem:[%s2 + $0x8] sm:$0xff] %vm335, %v315
    %338 = vst.msk [vmem:[%s2 + $0x10] sm:$0xff] %vm335, %v318
    %339 = vst.msk [vmem:[%s2 + $0x18] sm:$0xff] %vm335, %v321
    %340 = vst.msk [vmem:[%s2 + $0x20] sm:$0xff] %vm335, %v324
    %341 = vst.msk [vmem:[%s2 + $0x28] sm:$0xff] %vm335, %v327
    %342 = vst.msk [vmem:[%s2 + $0x30] sm:$0xff] %vm335, %v330
    %343 = vst.msk [vmem:[%s2 + $0x38] sm:$0xff] %vm335, %v333
    // Predicated region
    $region14: #{tpu_custom_call.1} parent=1 // pred_check
      _
    $region15: #{tpu_custom_call.1} parent=1 // pred_check_branch
      %345 = sbr.rel (0) target = $region17
    $region16: #{tpu_custom_call.1} parent=1 // pred_region
      _
    $region17: #{tpu_custom_call.1} parent=1 // pred_fallthru
      _
    // Predicated region
    $region18: #{tpu_custom_call.1} parent=1 // pred_check
      _
    $region19: #{tpu_custom_call.1} parent=1 // pred_check_branch
      %347 = sbr.rel (0) target = $region21
    $region20: #{tpu_custom_call.1} parent=1 // pred_region
      _
    $region21: #{tpu_custom_call.1} parent=1 // pred_fallthru
      _
    %348 = vsyncpa [#allocation3], 1

</llo_original>
